<compile_context>
chip_gen: v5e
topology: v5e:2x2
jax: 0.10.0
libtpu: 0.0.40
codegen_flags: <defaults>
</compile_context>

<pallas_src>
import jax
import jax.numpy as jnp
from jax.experimental import pallas as pl
from jax.experimental.pallas import tpu as pltpu

_EPS = 1e-5
_VMEM_SOFT_CAP = 44 << 20      # keep total footprint well under v7x's 64 MiB physical VMEM
_VMEM_LIMIT_MIN = 16 << 20
_VMEM_LIMIT_MAX = 48 << 20


def _stats(x32, axis):
    """Two-pass biased variance (numerically robust vs E[x^2]-E[x]^2)."""
    mu = jnp.mean(x32, axis=axis, keepdims=True)
    xc = x32 - mu
    var = jnp.mean(xc * xc, axis=axis, keepdims=True)
    inv = jax.lax.rsqrt(var + _EPS)            # EUP rsqrt (free slot vs VPU)
    return xc, inv


# ------------------- channel-first kernels: block is (1, C, T) ---------------

def _cfirst_biasfree_kernel(x_ref, w_ref, o_ref):
    x = x_ref[...].astype(jnp.float32)         # (1, C, T); no-op cast for f32 inputs
    _, inv = _stats(x, axis=1)
    o_ref[...] = (x * inv * w_ref[...]).astype(o_ref.dtype)


def _cfirst_withbias_kernel(x_ref, w_ref, b_ref, o_ref):
    x = x_ref[...].astype(jnp.float32)
    xc, inv = _stats(x, axis=1)
    o_ref[...] = (xc * inv * w_ref[...] + b_ref[...]).astype(o_ref.dtype)


# ------------------- channels-last kernels: block is (R, C) ------------------

def _clast_biasfree_kernel(x_ref, w_ref, o_ref):
    x = x_ref[...].astype(jnp.float32)         # (R, C)
    _, inv = _stats(x, axis=-1)
    o_ref[...] = (x * inv * w_ref[...]).astype(o_ref.dtype)


def _clast_withbias_kernel(x_ref, w_ref, b_ref, o_ref):
    x = x_ref[...].astype(jnp.float32)
    xc, inv = _stats(x, axis=-1)
    o_ref[...] = (xc * inv * w_ref[...] + b_ref[...]).astype(o_ref.dtype)


# ------------------------------ VMEM accounting -------------------------------

def _vmem_budget(block_elems, in_itemsize, out_itemsize):
    pipeline = 2 * block_elems * (in_itemsize + out_itemsize)   # double-buffered in + out
    temps = 3 * block_elems * 4                                 # f32 working copies in the body
    return pipeline + temps + (2 << 20)                         # resident params + slack


def _vmem_limit(budget):
    return int(min(max(budget, _VMEM_LIMIT_MIN), _VMEM_LIMIT_MAX))


# ------------------------------- wrappers -------------------------------------

def _ln_channel_first(x3, weight, bias=None, *, target_block_bytes=4 << 20,
                      min_parallel_steps=2):
    """x3: (B, C, L); normalize over axis 1. weight/bias: (C,)."""
    B, C, L = x3.shape
    itemsize = jnp.dtype(x3.dtype).itemsize

    # Dtype-aware lane tile: largest multiple of 128 (or full extent) within budget.
    cap = max(128, (target_block_bytes // max(1, C * itemsize)) // 128 * 128)
    tile_cols = L if L <= cap else cap

    # Guarantee >=2 parallel grid steps (v7x dual TensorCore) when L allows it.
    if B * pl.cdiv(L, tile_cols) < min_parallel_steps and L > 128:
        want = -(-min_parallel_steps // B)
        per = -(-L // want)
        tile_cols = min(tile_cols, max(128, -(-per // 128) * 128))

    # Clamp so pipelined blocks + f32 temps stay under the VMEM soft cap.
    while tile_cols > 128 and _vmem_budget(C * tile_cols, itemsize, itemsize) > _VMEM_SOFT_CAP:
        tile_cols = max(128, (tile_cols // 2) // 128 * 128)

    grid = (B, pl.cdiv(L, tile_cols))
    budget = _vmem_budget(C * tile_cols, itemsize, itemsize)

    x_spec = pl.BlockSpec((1, C, tile_cols), lambda b, j: (b, 0, j))
    p_spec = pl.BlockSpec((1, C, 1), lambda b, j: (0, 0, 0))     # constant -> resident
    o_spec = pl.BlockSpec((1, C, tile_cols), lambda b, j: (b, 0, j))
    w3 = weight.reshape(1, C, 1).astype(jnp.float32)              # pre-cast once on host

    if bias is None:
        kernel, in_specs, args = _cfirst_biasfree_kernel, [x_spec, p_spec], (x3, w3)
    else:
        b3 = bias.reshape(1, C, 1).astype(jnp.float32)
        kernel, in_specs, args = _cfirst_withbias_kernel, [x_spec, p_spec, p_spec], (x3, w3, b3)

    return pl.pallas_call(
        kernel,
        out_shape=jax.ShapeDtypeStruct((B, C, L), x3.dtype),
        grid_spec=pltpu.PrefetchScalarGridSpec(
            num_scalar_prefetch=0, grid=grid,
            in_specs=in_specs, out_specs=o_spec),
        compiler_params=pltpu.CompilerParams(
            dimension_semantics=("parallel", "parallel"),
            vmem_limit_bytes=_vmem_limit(budget)),
    )(*args)


def _ln_channels_last(x2, weight, bias=None, *, target_block_bytes=4 << 20,
                      min_parallel_steps=2):
    """x2: (M, C); normalize over the last (lane) axis. Use when C >= 128."""
    M, C = x2.shape
    itemsize = jnp.dtype(x2.dtype).itemsize

    cap = max(8, (target_block_bytes // max(1, C * itemsize)) // 8 * 8)
    tile_rows = M if M <= cap else cap

    if pl.cdiv(M, tile_rows) < min_parallel_steps and M > 8:
        per = -(-M // min_parallel_steps)
        tile_rows = min(tile_rows, max(8, -(-per // 8) * 8))

    while tile_rows > 8 and _vmem_budget(C * tile_rows, itemsize, itemsize) > _VMEM_SOFT_CAP:
        tile_rows = max(8, (tile_rows // 2) // 8 * 8)

    grid = (pl.cdiv(M, tile_rows),)
    budget = _vmem_budget(C * tile_rows, itemsize, itemsize)

    x_spec = pl.BlockSpec((tile_rows, C), lambda i: (i, 0))
    p_spec = pl.BlockSpec((1, C), lambda i: (0, 0))
    o_spec = pl.BlockSpec((tile_rows, C), lambda i: (i, 0))
    w2 = weight.reshape(1, C).astype(jnp.float32)

    if bias is None:
        kernel, in_specs, args = _clast_biasfree_kernel, [x_spec, p_spec], (x2, w2)
    else:
        b2 = bias.reshape(1, C).astype(jnp.float32)
        kernel, in_specs, args = _clast_withbias_kernel, [x_spec, p_spec, p_spec], (x2, w2, b2)

    return pl.pallas_call(
        kernel,
        out_shape=jax.ShapeDtypeStruct((M, C), x2.dtype),
        grid_spec=pltpu.PrefetchScalarGridSpec(
            num_scalar_prefetch=0, grid=grid,
            in_specs=in_specs, out_specs=o_spec),
        compiler_params=pltpu.CompilerParams(
            dimension_semantics=("parallel",),
            vmem_limit_bytes=_vmem_limit(budget)),
    )(*args)


# ------------------------------- public API -----------------------------------

def layernorm_nchw(x, weight, bias=None, **kwargs):
    """Fused to_3d -> (BiasFree|WithBias)_LayerNorm -> to_4d on an NCHW tensor.

    x: (B, C, H, W); weight/bias: (C,). Zero-copy Backbone path (no host-side
    transpose or padding). bias=None -> BiasFree variant."""
    B, C, H, W = x.shape
    out = _ln_channel_first(x.reshape(B, C, H * W), weight, bias, **kwargs)
    return out.reshape(B, C, H, W)


def biasfree_layernorm_nchw(x, weight, **kwargs):
    return layernorm_nchw(x, weight, None, **kwargs)


def layernorm(x, weight, bias=None, **kwargs):
    """Channels-last API: x (..., C), normalized over the last axis.

    For C >= 128 a dedicated lane-axis-reduce kernel runs directly on the
    channels-last layout (no HBM transposes); for small C the data is moved to
    channel-first so stores stay lane-dense."""
    orig_shape = x.shape
    C = orig_shape[-1]
    x2 = x.reshape(-1, C)
    if C >= 128:
        out2 = _ln_channels_last(x2, weight, bias, **kwargs)
    else:
        x3 = jnp.transpose(x2)[None]                          # (1, C, M)
        out2 = jnp.transpose(_ln_channel_first(x3, weight, bias, **kwargs)[0])
    return out2.reshape(orig_shape)


def biasfree_layernorm(x, weight, **kwargs):
    return layernorm(x, weight, None, **kwargs)


# ------------------------------- references -----------------------------------

def _ref_nchw(x, weight, bias=None):
    xf = x.astype(jnp.float32)
    mu = jnp.mean(xf, axis=1, keepdims=True)
    var = jnp.mean((xf - mu) ** 2, axis=1, keepdims=True)
    inv = 1.0 / jnp.sqrt(var + _EPS)
    w = weight.astype(jnp.float32)[None, :, None, None]
    if bias is None:
        y = xf * inv * w
    else:
        y = (xf - mu) * inv * w + bias.astype(jnp.float32)[None, :, None, None]
    return y.astype(x.dtype)


def _ref_channels_last(x, weight, bias=None):
    xf = x.astype(jnp.float32)
    mu = jnp.mean(xf, axis=-1, keepdims=True)
    var = jnp.mean((xf - mu) ** 2, axis=-1, keepdims=True)
    inv = 1.0 / jnp.sqrt(var + _EPS)
    if bias is None:
        y = xf * inv * weight.astype(jnp.float32)
    else:
        y = (xf - mu) * inv * weight.astype(jnp.float32) + bias.astype(jnp.float32)
    return y.astype(x.dtype)


if __name__ == "__main__":
    key = jax.random.PRNGKey(0)
    k = jax.random.split(key, 8)

    # 1) Backbone usage: BiasFree LayerNorm on an NCHW feature map (stage-1 dim=32).
    B, C, H, W = 2, 32, 16, 16
    x = jax.random.normal(k[0], (B, C, H, W), dtype=jnp.float32)
    w = 1.0 + 0.1 * jax.random.normal(k[1], (C,), dtype=jnp.float32)
    b = 0.05 * jax.random.normal(k[2], (C,), dtype=jnp.float32)

    out = jax.block_until_ready(biasfree_layernorm_nchw(x, w))
    assert out.shape == x.shape and out.dtype == x.dtype
    assert jnp.allclose(out, _ref_nchw(x, w), atol=1e-4, rtol=1e-4), "BiasFree NCHW mismatch"

    # 2) WithBias variant (the default LayerNorm_type inside TransformerBlock).
    out_wb = jax.block_until_ready(layernorm_nchw(x, w, b))
    assert jnp.allclose(out_wb, _ref_nchw(x, w, b), atol=1e-4, rtol=1e-4), "WithBias NCHW mismatch"

    # 3) Channels-last API, C >= 128: dedicated lane-reduce kernel (no HBM transposes).
    Cl = 128
    y = jax.random.normal(k[3], (2, 64, Cl), dtype=jnp.float32)
    wl = 1.0 + 0.1 * jax.random.normal(k[4], (Cl,), dtype=jnp.float32)
    out_cl = jax.block_until_ready(biasfree_layernorm(y, wl))
    assert jnp.allclose(out_cl, _ref_channels_last(y, wl), atol=1e-4, rtol=1e-4), \
        "C>=128 channels-last mismatch"

    # 4) Channels-last API, small C: transpose -> channel-first fallback path.
    C2 = 32
    y2 = jax.random.normal(k[5], (2, 64, C2), dtype=jnp.float32)
    w2 = 1.0 + 0.1 * jax.random.normal(k[6], (C2,), dtype=jnp.float32)
    out_s = jax.block_until_ready(biasfree_layernorm(y2, w2))
    assert jnp.allclose(out_s, _ref_channels_last(y2, w2), atol=1e-4, rtol=1e-4), \
        "small-C channels-last mismatch"

    # 5) Ragged lane tile + multi-step grid (forced tiny tile, L = 225).
    xr = jax.random.normal(k[7], (2, 32, 15, 15), dtype=jnp.float32)
    out_r = jax.block_until_ready(
        biasfree_layernorm_nchw(xr, w, target_block_bytes=32 * 128 * 4))
    assert jnp.allclose(out_r, _ref_nchw(xr, w), atol=1e-4, rtol=1e-4), "ragged-tile mismatch"

    # 6) bf16 path (exercises dtype-aware tile sizing / VMEM accounting).
    xb = x.astype(jnp.bfloat16)
    out_b = jax.block_until_ready(biasfree_layernorm_nchw(xb, w))
    assert out_b.dtype == jnp.bfloat16
    assert jnp.allclose(out_b.astype(jnp.float32),
                        _ref_nchw(xb, w).astype(jnp.float32),
                        atol=2e-2, rtol=2e-2), "bf16 path mismatch"

    print("KERNEL_OK")
</pallas_src>

<mosaic_0001>
module attributes {stable_mosaic.version = 11 : i64} {
  func.func @_cfirst_biasfree_kernel(%arg0: i32, %arg1: i32, %arg2: memref<1x32x256xf32, #tpu.memory_space<vmem>>, %arg3: memref<1x32x1xf32, #tpu.memory_space<vmem>>, %arg4: memref<1x32x256xf32, #tpu.memory_space<vmem>>) attributes {dimension_semantics = [#tpu.dimension_semantics<parallel>, #tpu.dimension_semantics<parallel>], iteration_bounds = array<i64: 2, 1>, scalar_prefetch = 0 : i64, scratch_operands = 0 : i64, tpu.core_type = #tpu.core_type<tc>, window_params = [{transform_indices = @transform_0, window_bounds = array<i64: 1, 32, 256>}, {pipeline_mode = #tpu.pipeline_mode<synchronous>, transform_indices = @transform_1, window_bounds = array<i64: 1, 32, 1>}, {transform_indices = @transform_2, window_bounds = array<i64: 1, 32, 256>}]} {
    %c0 = arith.constant 0 : index
    %c0_0 = arith.constant 0 : index
    %c0_1 = arith.constant 0 : index
    %0 = vector.load %arg2[%c0, %c0_0, %c0_1] : memref<1x32x256xf32, #tpu.memory_space<vmem>>, vector<1x32x256xf32>
    %cst = arith.constant dense<0.000000e+00> : vector<1x256xf32>
    %1 = vector.multi_reduction <add>, %0, %cst [1] : vector<1x32x256xf32> to vector<1x256xf32>
    %2 = vector.shape_cast %1 : vector<1x256xf32> to vector<1x1x256xf32>
    %cst_2 = arith.constant 3.200000e+01 : f32
    %3 = vector.broadcast %cst_2 : f32 to vector<1x1x256xf32>
    %4 = arith.divf %2, %3 : vector<1x1x256xf32>
    %5 = vector.broadcast %4 : vector<1x1x256xf32> to vector<1x32x256xf32>
    %6 = arith.subf %0, %5 : vector<1x32x256xf32>
    %7 = arith.mulf %6, %6 : vector<1x32x256xf32>
    %cst_3 = arith.constant dense<0.000000e+00> : vector<1x256xf32>
    %8 = vector.multi_reduction <add>, %7, %cst_3 [1] : vector<1x32x256xf32> to vector<1x256xf32>
    %9 = vector.shape_cast %8 : vector<1x256xf32> to vector<1x1x256xf32>
    %cst_4 = arith.constant 3.200000e+01 : f32
    %10 = vector.broadcast %cst_4 : f32 to vector<1x1x256xf32>
    %11 = arith.divf %9, %10 : vector<1x1x256xf32>
    %cst_5 = arith.constant 9.99999974E-6 : f32
    %12 = vector.broadcast %cst_5 : f32 to vector<1x1x256xf32>
    %13 = arith.addf %11, %12 : vector<1x1x256xf32>
    %14 = math.rsqrt %13 : vector<1x1x256xf32>
    %15 = vector.broadcast %14 : vector<1x1x256xf32> to vector<1x32x256xf32>
    %16 = arith.mulf %0, %15 : vector<1x32x256xf32>
    %c0_6 = arith.constant 0 : index
    %c0_7 = arith.constant 0 : index
    %c0_8 = arith.constant 0 : index
    %17 = vector.load %arg3[%c0_6, %c0_7, %c0_8] : memref<1x32x1xf32, #tpu.memory_space<vmem>>, vector<1x32x1xf32>
    %18 = vector.broadcast %17 : vector<1x32x1xf32> to vector<1x32x256xf32>
    %19 = arith.mulf %16, %18 : vector<1x32x256xf32>
    %c0_9 = arith.constant 0 : index
    %c0_10 = arith.constant 0 : index
    %c0_11 = arith.constant 0 : index
    %20 = vector.load %arg4[%c0_9, %c0_10, %c0_11] : memref<1x32x256xf32, #tpu.memory_space<vmem>>, vector<1x32x256xf32>
    tpu.vector_store %arg4[%c0_9, %c0_10, %c0_11], %19 {strides = array<i32>} : memref<1x32x256xf32, #tpu.memory_space<vmem>>, vector<1x32x256xf32>,
    return
  }
  func.func @transform_0(%arg0: i32, %arg1: i32) -> (i32, i32, i32) {
    %c0_i32 = arith.constant 0 : i32
    %c0_i32_0 = arith.constant 0 : i32
    return %arg0, %c0_i32, %arg1 : i32, i32, i32
  }
  func.func @transform_1(%arg0: i32, %arg1: i32) -> (i32, i32, i32) {
    %c0_i32 = arith.constant 0 : i32
    %c0_i32_0 = arith.constant 0 : i32
    %c0_i32_1 = arith.constant 0 : i32
    %c0_i32_2 = arith.constant 0 : i32
    return %c0_i32, %c0_i32_0, %c0_i32_1 : i32, i32, i32
  }
  func.func @transform_2(%arg0: i32, %arg1: i32) -> (i32, i32, i32) {
    %c0_i32 = arith.constant 0 : i32
    %c0_i32_0 = arith.constant 0 : i32
    return %arg0, %c0_i32, %arg1 : i32, i32, i32
  }
}

</mosaic_0001>

<llo_original>
// kernel: tpu_custom_call.1
$region0: #{tpu_custom_call.1}
  #allocation0 [shape = 'u32[]', space=smem, size = 0x4, offset = 0x4, fixed_abs, tag = 'smem constant byte address 0x4 - core index']
  #allocation1 [shape = 'u32[72,128]{1,0:T(1,128)}', space=vmem, size = 0x9000, scoped, tag = 'internal scratch']
  %s0 = inlined_call_operand.hbm [shape: f32[2,32,256], index: 0, kind: input, shape index: {}]
  %s1 = inlined_call_operand.vmem [shape: f32[1,32,1], index: 1, kind: input, shape index: {}]
  %s2 = inlined_call_operand.hbm [shape: f32[2,32,256], index: 2, kind: output, shape index: {}]
  %s3 = sld [smem:[#allocation0]]
  $region45: #{tpu_custom_call.1} parent=0
    _
  %s5 = ssub.s32 1, %s3
  %s6 = scalar_select 0, %s5, %s3
  $region1: #{tpu_custom_call.1} parent=0
    #allocation2 [shape = 'u8[65536]{0}', space=vmem, size = 0x10000, scoped, tag = 'input window, operand 0']
    #allocation3 [shape = 's32[2]{0}', space=sflag, size = 0x8, scoped, tag = 'scoped memory for tpu_custom_call.1']
    #allocation4 [shape = 's32[2]{0}', space=sflag, size = 0x8, scoped, tag = 'scoped memory for tpu_custom_call.1']
    #allocation5 [shape = 'u8[65536]{0}', space=vmem, size = 0x10000, scoped, tag = 'output window, operand 0']
    %7 = vsyncpa [#allocation3], 0
    %s8 = scalar_lea.sflag [#allocation3], 1
    %9 = vsyncpa %s8, 0
    %10 = vsyncpa [#allocation4], 0
    %s11 = scalar_lea.sflag [#allocation4], 1
    %12 = vsyncpa %s11, 0
    loop: start=0, step=1, limit=4
    $region2: #{tpu_custom_call.1} parent=1 // loop_pre_header
      _
    $region3: #{tpu_custom_call.1} parent=1 // loop_header
      %s14 = sphi 0, %s18
      %p15 = scmp.ge.s32.totalorder %s14, 4
      %s21 = sphi 0, %s33
      %s22 = sphi 0, %s29
      %s23 = sphi 0, %s21
      %s24 = sphi 0, %s22
      %s25 = sphi 0, %s23
      %s26 = sphi 0, %s24
      %s38 = sphi 0, %s40
      %s41 = sphi 0, %s38
      %s42 = sphi 0, %s41
      %s58 = sphi 0, %s42
      %s62 = sphi 0, %s62
      %s64 = sphi 0, %s62
      %s65 = sphi 0, %s64
      %s79 = sphi 0, %s65
      %s87 = sphi 0, %s89
      %s90 = sphi 0, %s87
      %s91 = sphi 0, %s90
      %s107 = sphi 0, %s91
    $region4: #{tpu_custom_call.1} parent=1 // loop_header_branch
      %17 = sbr.rel (%p15) target = $region8
    $region5: #{tpu_custom_call.1} parent=1 // loop_body
      %s19 = ssub.s32 %s14, 1
      %s20 = ssub.s32 %s14, 2
      %s27 = sadd.s32 1, %s22
      %p28 = scmp.ge.s32.totalorder %s27, 1
      %s29 = scalar_select %p28, 0, %s27
      %s30 = sadd.s32 1, %s21
      %s31 = scalar_select %p28, %s30, %s21
      %p32 = scmp.ge.s32.totalorder %s31, 2
      %s33 = scalar_select %p32, 0, %s31
      %s34 = ssub.s32 %s21, %s33
      %s35 = ssub.s32 %s22, %s29
      %s36 = sor.u32 %s34, %s35
      %p37 = scmp.eq.s32.totalorder %s36, 0
      %s39 = sadd.s32 %s38, 1
      %s40 = scalar_select %p37, %s38, %s39
      %p43 = pneg %p37
      %p44 = scmp.eq.s32.totalorder %s14, 1
      %p45 = por %p43, %p44
      %p46 = scmp.ne.s32.totalorder %s38, %s41
      %p47 = scmp.eq.s32.totalorder %s14, 0
      %p48 = por %p46, %p47
      %p49 = scmp.ne.s32.totalorder %s38, %s41
      %p50 = scmp.eq.s32.totalorder %s19, 1
      %p51 = por %p49, %p50
      %p52 = scmp.ne.s32.totalorder %s41, %s42
      %p53 = scmp.eq.s32.totalorder %s19, 0
      %p54 = por %p52, %p53
      %p55 = scmp.ne.s32.totalorder %s41, %s42
      %p56 = scmp.eq.s32.totalorder %s20, 1
      %p57 = por %p55, %p56
      %p59 = scmp.ne.s32.totalorder %s42, %s58
      %p60 = scmp.eq.s32.totalorder %s20, 0
      %p61 = por %p59, %p60
      %s63 = sadd.s32 %s62, 1
      %p66 = scmp.eq.s32.totalorder %s14, 1
      %p67 = scmp.ne.s32.totalorder %s62, %s64
      %p68 = scmp.eq.s32.totalorder %s14, 0
      %p69 = por %p67, %p68
      %p70 = scmp.ne.s32.totalorder %s62, %s64
      %p71 = scmp.eq.s32.totalorder %s19, 1
      %p72 = por %p70, %p71
      %p73 = scmp.ne.s32.totalorder %s64, %s65
      %p74 = scmp.eq.s32.totalorder %s19, 0
      %p75 = por %p73, %p74
      %p76 = scmp.ne.s32.totalorder %s64, %s65
      %p77 = scmp.eq.s32.totalorder %s20, 1
      %p78 = por %p76, %p77
      %p80 = scmp.ne.s32.totalorder %s65, %s79
      %p81 = scmp.eq.s32.totalorder %s20, 0
      %p82 = por %p80, %p81
      %s83 = ssub.s32 %s21, %s33
      %s84 = ssub.s32 %s22, %s29
      %s85 = sor.u32 %s83, %s84
      %p86 = scmp.eq.s32.totalorder %s85, 0
      %s88 = sadd.s32 %s87, 1
      %s89 = scalar_select %p86, %s87, %s88
      %p92 = pneg %p86
      %p93 = scmp.eq.s32.totalorder %s14, 1
      %p94 = por %p92, %p93
      %p95 = scmp.ne.s32.totalorder %s87, %s90
      %p96 = scmp.eq.s32.totalorder %s14, 0
      %p97 = por %p95, %p96
      %p98 = scmp.ne.s32.totalorder %s87, %s90
      %p99 = scmp.eq.s32.totalorder %s19, 1
      %p100 = por %p98, %p99
      %p101 = scmp.ne.s32.totalorder %s90, %s91
      %p102 = scmp.eq.s32.totalorder %s19, 0
      %p103 = por %p101, %p102
      %p104 = scmp.ne.s32.totalorder %s90, %s91
      %p105 = scmp.eq.s32.totalorder %s20, 1
      %p106 = por %p104, %p105
      %p108 = scmp.ne.s32.totalorder %s91, %s107
      %p109 = scmp.eq.s32.totalorder %s20, 0
      %p110 = por %p108, %p109
      %p111 = scmp.le.s32.totalorder 1, %s14
      %p112 = scmp.lt.s32.totalorder %s14, 3
      %p113 = pnand %p111, %p112
      %p114 = pneg %p113
      // Predicated region
      $region9: #{tpu_custom_call.1} parent=5 // pred_check
        _
      $region10: #{tpu_custom_call.1} parent=5 // pred_check_branch
        %116 = sbr.rel (%p113) target = $region12
      $region11: #{tpu_custom_call.1} parent=5 // pred_region
        %s117 = ssub.s32 %s14, 1
        // Predicated region
        $region13: #{tpu_custom_call.1} parent=11 // pred_check
          %p118 = pneg %p75
        $region14: #{tpu_custom_call.1} parent=11 // pred_check_branch
          %120 = sbr.rel (%p118) target = $region16
        $region15: #{tpu_custom_call.1} parent=11 // pred_region
          _
        $region16: #{tpu_custom_call.1} parent=11 // pred_fallthru
          _
      $region12: #{tpu_custom_call.1} parent=5 // pred_fallthru
        _
      %p121 = scmp.lt.s32.totalorder %s14, 2
      // Predicated region
      $region17: #{tpu_custom_call.1} parent=5 // pred_check
        %p122 = pneg %p121
      $region18: #{tpu_custom_call.1} parent=5 // pred_check_branch
        %124 = sbr.rel (%p122) target = $region20
      $region19: #{tpu_custom_call.1} parent=5 // pred_region
        // Predicated region
        $region21: #{tpu_custom_call.1} parent=19 // pred_check
          %p125 = pneg %p48
        $region22: #{tpu_custom_call.1} parent=19 // pred_check_branch
          %127 = sbr.rel (%p125) target = $region24
        $region23: #{tpu_custom_call.1} parent=19 // pred_region
          %s128 = sand.u32 %s38, 1
          %s129 = scalar_lea.sflag [#allocation3], %s128
          %s130 = sand.u32 %s38, 1
          %s131 = smul.addr %s130, 64
          %s132 = scalar_lea.vmem [#allocation2], %s131
          %s133 = smul.u32 2, %s22
          %135 = vsyncadd %s129, 0
          %s136 = smul.addr %s21, 8
          %s137 = sadd.s32 %s133, %s136
          %s138 = smul.addr %s137, 8
          %s139 = scalar_lea.hbm %s0, %s138
          %s140 = sshll.u32 %s139, 4
          %s141 = int_to_ptr.hbm [resolvable:$true] %s140
          %s142 = sshll.u32 %s132, 4
          %s143 = int_to_ptr.vmem [resolvable:$true] %s142
          %148 = dma.hbm_to_vmem [thread:$0]  %s141, 1024, %s143, %s129, 256, 256, 16
        $region24: #{tpu_custom_call.1} parent=19 // pred_fallthru
          _
      $region20: #{tpu_custom_call.1} parent=5 // pred_fallthru
        _
      %p149 = scmp.le.s32.totalorder 1, %s14
      %p150 = scmp.lt.s32.totalorder %s14, 3
      %p151 = pnand %p149, %p150
      %p152 = pneg %p151
      // Predicated region
      $region25: #{tpu_custom_call.1} parent=5 // pred_check
        _
      $region26: #{tpu_custom_call.1} parent=5 // pred_check_branch
        %154 = sbr.rel (%p151) target = $region28
      $region27: #{tpu_custom_call.1} parent=5 // pred_region
        %s155 = ssub.s32 %s14, 1
        %s156 = sand.u32 %s41, 1
        %s157 = scalar_lea.sflag [#allocation3], %s156
        %s158 = sand.u32 %s41, 1
        %s159 = smul.addr %s158, 64
        %s160 = scalar_lea.vmem [#allocation2], %s159
        // Predicated region
        $region29: #{tpu_custom_call.1} parent=27 // pred_check
          %p161 = pneg %p54
        $region30: #{tpu_custom_call.1} parent=27 // pred_check_branch
          %163 = sbr.rel (%p161) target = $region32
        $region31: #{tpu_custom_call.1} parent=27 // pred_region
          %165 = dma.done %s157, 1024
        $region32: #{tpu_custom_call.1} parent=27 // pred_fallthru
          _
        %s166 = sand.u32 %s41, 1
        %s167 = scalar_lea.sflag [#allocation3], %s166
        %s168 = sand.u32 %s41, 1
        %s169 = smul.addr %s168, 64
        %s170 = scalar_lea.vmem [#allocation2], %s169
        %p171 = pneg %p54
        %p172 = pneg %p51
        %p173 = pneg %p75
        %p174 = pneg %p72
        %p175 = pneg %p103
        %p176 = pneg %p100
        %s177 = sand.u32 %s90, 1
        %s178 = scalar_lea.sflag [#allocation4], %s177
        %s179 = sand.u32 %s90, 1
        %s180 = smul.addr %s179, 64
        %s181 = scalar_lea.vmem [#allocation5], %s180
        %s182 = smul.u32 2, %s24
        %s183 = smul.u32 2, %s24
        %v184 = vld [vmem:[%s160] sm:$0xff]
        %v185 = vld [vmem:[%s160 + $0x8] sm:$0xff]
        %v186 = vld [vmem:[%s160 + $0x10] sm:$0xff]
        %v187 = vld [vmem:[%s160 + $0x18] sm:$0xff]
        %v188 = vld [vmem:[%s160 + $0x20] sm:$0xff]
        %v189 = vld [vmem:[%s160 + $0x28] sm:$0xff]
        %v190 = vld [vmem:[%s160 + $0x30] sm:$0xff]
        %v191 = vld [vmem:[%s160 + $0x38] sm:$0xff]
        %v192 = vadd.f32 %v184, %v186
        %v193 = vadd.f32 %v192, %v188
        %v194 = vadd.f32 %v193, %v190
        %v195 = vrot.slane %v194, 4
        %v196 = vadd.f32 %v194, %v195
        %v197 = vrot.slane %v196, 2
        %v198 = vadd.f32 %v196, %v197
        %v199 = vrot.slane %v198, 1
        %v200 = vadd.f32 %v198, %v199
        %v201 = vadd.f32 %v185, %v187
        %v202 = vadd.f32 %v201, %v189
        %v203 = vadd.f32 %v202, %v191
        %v204 = vrot.slane %v203, 4
        %v205 = vadd.f32 %v203, %v204
        %v206 = vrot.slane %v205, 2
        %v207 = vadd.f32 %v205, %v206
        %v208 = vrot.slane %v207, 1
        %v209 = vadd.f32 %v207, %v208
        %v210 = vrcp.pop 32.0
        %v211 = vmul.f32 32.0, %v210
        %v212 = vsub.f32 1.0, %v211
        %v213 = vmul.f32 %v210, %v212
        %v214 = vadd.f32 %v210, %v213
        %vm215 = vweird.f32 %v210
        %v216 = vsel %vm215, %v210, %v214
        %v217 = vmul.f32 %v200, %v216
        %v218 = vmul.f32 %v209, %v216
        %v219 = vsub.f32 %v184, %v217
        %v220 = vsub.f32 %v185, %v218
        %v221 = vsub.f32 %v186, %v217
        %v222 = vsub.f32 %v187, %v218
        %v223 = vsub.f32 %v188, %v217
        %v224 = vsub.f32 %v189, %v218
        %v225 = vsub.f32 %v190, %v217
        %v226 = vsub.f32 %v191, %v218
        %v227 = vmul.f32 %v219, %v219
        %v228 = vmul.f32 %v220, %v220
        %v229 = vmul.f32 %v221, %v221
        %v230 = vmul.f32 %v222, %v222
        %v231 = vmul.f32 %v223, %v223
        %v232 = vmul.f32 %v224, %v224
        %v233 = vmul.f32 %v225, %v225
        %v234 = vmul.f32 %v226, %v226
        %v235 = vadd.f32 %v227, %v229
        %v236 = vadd.f32 %v235, %v231
        %v237 = vadd.f32 %v236, %v233
        %v238 = vrot.slane %v237, 4
        %v239 = vadd.f32 %v237, %v238
        %v240 = vrot.slane %v239, 2
        %v241 = vadd.f32 %v239, %v240
        %v242 = vrot.slane %v241, 1
        %v243 = vadd.f32 %v241, %v242
        %v244 = vadd.f32 %v228, %v230
        %v245 = vadd.f32 %v244, %v232
        %v246 = vadd.f32 %v245, %v234
        %v247 = vrot.slane %v246, 4
        %v248 = vadd.f32 %v246, %v247
        %v249 = vrot.slane %v248, 2
        %v250 = vadd.f32 %v248, %v249
        %v251 = vrot.slane %v250, 1
        %v252 = vadd.f32 %v250, %v251
        %v253 = vmul.f32 %v243, %v216
        %v254 = vmul.f32 %v252, %v216
        %v255 = vadd.f32 %v253, 1e-05
        %v256 = vadd.f32 %v254, 1e-05
        %v257 = vrsqrt.pop %v255
        %v258 = vmul.f32 %v257, %v255
        %v259 = vmul.f32 %v258, %v257
        %v260 = vmul.f32 0.5, %v259
        %v261 = vsub.f32 1.5, %v260
        %v262 = vmul.f32 %v257, %v261
        %vm263 = vweird.f32 %v255
        %vm264 = vweird.f32 %v257
        %vm265 = vmor %vm263, %vm264
        %v266 = vsel %vm265, %v257, %v262
        %v267 = vrsqrt.pop %v256
        %v268 = vmul.f32 %v267, %v256
        %v269 = vmul.f32 %v268, %v267
        %v270 = vmul.f32 0.5, %v269
        %v271 = vsub.f32 1.5, %v270
        %v272 = vmul.f32 %v267, %v271
        %vm273 = vweird.f32 %v256
        %vm274 = vweird.f32 %v267
        %vm275 = vmor %vm273, %vm274
        %v276 = vsel %vm275, %v267, %v272
        %v277 = vmul.f32 %v184, %v266
        %v278 = vmul.f32 %v185, %v276
        %v279 = vmul.f32 %v186, %v266
        %v280 = vmul.f32 %v187, %v276
        %v281 = vmul.f32 %v188, %v266
        %v282 = vmul.f32 %v189, %v276
        %v283 = vmul.f32 %v190, %v266
        %v284 = vmul.f32 %v191, %v276
        %v285 = vld [vmem:[%s1] sm:$0xff]
        %v286 = vld [vmem:[%s1 + $0x8] sm:$0xff]
        %v287 = vld [vmem:[%s1 + $0x10] sm:$0xff]
        %v288 = vld [vmem:[%s1 + $0x18] sm:$0xff]
        %290 = vset.pattern.permute.xlu0 0
        %291 = vperm.xlu0 %290, %v285
        %v292 = vpop.permute.xlu0 %291
        %295 = vset.pattern.permute.xlu0 0
        %296 = vperm.xlu0 %295, %v286
        %v297 = vpop.permute.xlu0 %296
        %300 = vset.pattern.permute.xlu0 0
        %301 = vperm.xlu0 %300, %v287
        %v302 = vpop.permute.xlu0 %301
        %305 = vset.pattern.permute.xlu0 0
        %306 = vperm.xlu0 %305, %v288
        %v307 = vpop.permute.xlu0 %306
        %v309 = vmul.f32 %v277, %v292
        %v310 = vmul.f32 %v278, %v292
        %v311 = vmul.f32 %v279, %v297
        %v312 = vmul.f32 %v280, %v297
        %v313 = vmul.f32 %v281, %v302
        %v314 = vmul.f32 %v282, %v302
        %v315 = vmul.f32 %v283, %v307
        %v316 = vmul.f32 %v284, %v307
        %317 = vst [vmem:[%s181] sm:$0xff] %v309
        %318 = vst [vmem:[%s181 + $0x8] sm:$0xff] %v310
        %319 = vst [vmem:[%s181 + $0x10] sm:$0xff] %v311
        %320 = vst [vmem:[%s181 + $0x18] sm:$0xff] %v312
        %321 = vst [vmem:[%s181 + $0x20] sm:$0xff] %v313
        %322 = vst [vmem:[%s181 + $0x28] sm:$0xff] %v314
        %323 = vst [vmem:[%s181 + $0x30] sm:$0xff] %v315
        %324 = vst [vmem:[%s181 + $0x38] sm:$0xff] %v316
        %s325 = sand.u32 %s90, 1
        %s326 = scalar_lea.sflag [#allocation4], %s325
        %s327 = sand.u32 %s90, 1
        %s328 = smul.addr %s327, 64
        %s329 = scalar_lea.vmem [#allocation5], %s328
        // Predicated region
        $region33: #{tpu_custom_call.1} parent=27 // pred_check
          %p330 = pneg %p100
        $region34: #{tpu_custom_call.1} parent=27 // pred_check_branch
          %332 = sbr.rel (%p330) target = $region36
        $region35: #{tpu_custom_call.1} parent=27 // pred_region
          %s333 = smul.u32 2, %s24
          %335 = vsyncadd %s326, 0
          %s336 = smul.addr %s23, 8
          %s337 = sadd.s32 %s333, %s336
          %s338 = smul.addr %s337, 8
          %s339 = scalar_lea.hbm %s2, %s338
          %s340 = sshll.u32 %s329, 4
          %s341 = int_to_ptr.vmem [resolvable:$true] %s340
          %s342 = sshll.u32 %s339, 4
          %s343 = int_to_ptr.hbm [resolvable:$true] %s342
          %348 = dma.vmem_to_hbm [thread:$0]  %s341, 1024, %s343, %s326, 256, 256, 16
        $region36: #{tpu_custom_call.1} parent=27 // pred_fallthru
          _
      $region28: #{tpu_custom_call.1} parent=5 // pred_fallthru
        _
      %p349 = scmp.le.s32.totalorder 2, %s14
      // Predicated region
      $region37: #{tpu_custom_call.1} parent=5 // pred_check
        %p350 = pneg %p349
      $region38: #{tpu_custom_call.1} parent=5 // pred_check_branch
        %352 = sbr.rel (%p350) target = $region40
      $region39: #{tpu_custom_call.1} parent=5 // pred_region
        %s353 = ssub.s32 %s14, 2
        // Predicated region
        $region41: #{tpu_custom_call.1} parent=39 // pred_check
          %p354 = pneg %p106
        $region42: #{tpu_custom_call.1} parent=39 // pred_check_branch
          %356 = sbr.rel (%p354) target = $region44
        $region43: #{tpu_custom_call.1} parent=39 // pred_region
          %s357 = sand.u32 %s91, 1
          %s358 = scalar_lea.sflag [#allocation4], %s357
          %s359 = sand.u32 %s91, 1
          %s360 = smul.addr %s359, 64
          %s361 = scalar_lea.vmem [#allocation5], %s360
          %363 = dma.done %s358, 1024
        $region44: #{tpu_custom_call.1} parent=39 // pred_fallthru
          _
      $region40: #{tpu_custom_call.1} parent=5 // pred_fallthru
        _
    $region6: #{tpu_custom_call.1} parent=1 // loop_footer
      %s18 = sadd.s32 1, %s14
    $region7: #{tpu_custom_call.1} parent=1 // loop_footer_branch
      %13 = sbr.rel target = $region3
    $region8: #{tpu_custom_call.1} parent=1 // loop_exit
      _
    %364 = vsyncpa [#allocation3], 1
    %s365 = scalar_lea.sflag [#allocation3], 1
    %366 = vsyncpa %s365, 1
    %367 = vsyncpa [#allocation4], 1
    %s368 = scalar_lea.sflag [#allocation4], 1
    %369 = vsyncpa %s368, 1

</llo_original>
